<compile_context>
chip_gen: v7x
topology: tpu7x:2x2x1
jax: 0.10.0
libtpu: 0.0.40
codegen_flags: <defaults>
</compile_context>

<pallas_src>
from typing import Any, NamedTuple

import jax
import jax.numpy as jnp
import numpy as np
from jax.experimental import pallas as pl
from jax.experimental.pallas import tpu as pltpu


def _round_up(x, m):
    return ((x + m - 1) // m) * m


def _lane(c):
    return _round_up(c, 128)


def _vmem_capacity_bytes():
    try:
        return int(pltpu.get_tpu_info().vmem_capacity_bytes)
    except Exception:
        return 64 * 1024 * 1024  # v7x per-TensorCore physical VMEM (smallest gen)


def _choose_tiles(n_dst, n_src, tm_target, tk_target):
    # Row tile: multiple of 16 (bf16 sublane packing).  For large row counts,
    # use 256-multiples and keep >= 2 row tiles so the "parallel" row axis can
    # shard across both v7x TensorCores.
    if n_dst <= tm_target:
        tm = _round_up(n_dst, 16)
    else:
        tm = min(tm_target, max(256, _round_up((n_dst + 1) // 2, 256)))
    tk = min(tk_target, _round_up(n_src, 128))
    return tm, tk


class AdjacencyPlan(NamedTuple):
    adj: Any          # (n_dst_p, n_src_p) stream_dtype, zero padded
    nnz: Any          # (n_row_tiles,) int32: # of non-empty K blocks per row tile
    tbl: Any          # (n_row_tiles, max_nnz) int32: K-block schedule
    tm: int
    tk: int
    n_dst: int
    n_src: int
    max_nnz: int
    stream_dtype: Any


def prepare_adjacency(adj, *, tm_target=512, tk_target=2048,
                      stream_dtype=jnp.bfloat16):
    """One-time (amortized) preprocessing of a static adjacency matrix:
    cast to the streaming dtype, zero-pad to tile multiples, and build the
    block-sparse schedule of non-empty (tm, tk) blocks."""
    adj_np = np.asarray(jax.device_get(adj), dtype=np.float32)
    n_dst, n_src = adj_np.shape
    tm, tk = _choose_tiles(n_dst, n_src, tm_target, tk_target)
    n_dst_p, n_src_p = _round_up(n_dst, tm), _round_up(n_src, tk)

    adj_pad = np.zeros((n_dst_p, n_src_p), dtype=np.float32)
    adj_pad[:n_dst, :n_src] = adj_np
    n_i, n_k = n_dst_p // tm, n_src_p // tk

    # Which (row-tile, K-tile) blocks have any non-zero entry.
    nz = np.abs(adj_pad).reshape(n_i, tm, n_k, tk).sum(axis=(1, 3)) > 0.0
    nnz = nz.sum(axis=1).astype(np.int32)                      # (n_i,)
    max_nnz = max(int(nnz.max()), 1)
    tbl = np.zeros((n_i, max_nnz), dtype=np.int32)
    for i in range(n_i):
        idx = np.flatnonzero(nz[i]).astype(np.int32)
        if idx.size:
            tbl[i, :idx.size] = idx
            # Padded slots repeat the last valid block: the pipeline issues no
            # new DMA (same block index) and compute is gated off in-kernel.
            tbl[i, idx.size:] = idx[-1]

    return AdjacencyPlan(
        adj=jnp.asarray(adj_pad).astype(stream_dtype),
        nnz=jnp.asarray(nnz), tbl=jnp.asarray(tbl),
        tm=tm, tk=tk, n_dst=n_dst, n_src=n_src, max_nnz=max_nnz,
        stream_dtype=jnp.dtype(stream_dtype))


def _make_gcn_kernel(tk, src_resident):
    def kernel(nnz_ref, tbl_ref, adj_ref, src_ref, self_ref, d_ref, out_ref):
        # Grid = (row tiles, schedule position); schedule axis is the reduction.
        #   nnz_ref : (n_i,)          SMEM  non-empty block count per row tile
        #   tbl_ref : (n_i, max_nnz)  SMEM  K-block schedule
        #   adj_ref : (tm, tk)        VMEM  adjacency block (stream dtype)
        #   src_ref : (tk, F) or (n_src_p, F)  VMEM  source embeddings
        #   self_ref: (tm, F) f32, d_ref: (tm, 1) f32
        #   out_ref : (tm, F) f32     VMEM-resident across the schedule axis
        i = pl.program_id(0)
        s = pl.program_id(1)

        @pl.when(s == 0)
        def _init():
            # Self/degree term: self_embedding * d (padded rows are exact zeros).
            out_ref[...] = self_ref[...] * d_ref[...]

        @pl.when(s < nnz_ref[i])
        def _accumulate():
            if src_resident:
                kblk = tbl_ref[i, s]
                start = pl.multiple_of(kblk * tk, tk)
                src = src_ref[pl.ds(start, tk), :]
            else:
                src = src_ref[...]
            out_ref[...] += jnp.dot(adj_ref[...], src,
                                    preferred_element_type=jnp.float32)

    return kernel


def gcn_propagate(plan, src_emb, self_emb, d_col, *, src_resident=None):
    """Returns adj @ src_emb + self_emb * d_col  with shape (n_dst, F), f32."""
    tm, tk = plan.tm, plan.tk
    n_dst_p, n_src_p = plan.adj.shape
    n_i = n_dst_p // tm
    f = src_emb.shape[-1]
    assert src_emb.shape == (plan.n_src, f)
    assert self_emb.shape == (plan.n_dst, f)
    assert d_col.shape == (plan.n_dst, 1)

    itemsize = plan.stream_dtype.itemsize
    src_vmem = n_src_p * _lane(f) * itemsize
    if src_resident is None:
        # Keep the whole source-embedding table VMEM-resident when small:
        # removes the per-schedule-entry (tk, F) re-fetch (~F/tm extra traffic).
        src_resident = src_vmem <= 4 * 1024 * 1024

    src_p = jnp.pad(src_emb.astype(jnp.float32),
                    ((0, n_src_p - plan.n_src), (0, 0))).astype(plan.stream_dtype)
    self_p = jnp.pad(self_emb.astype(jnp.float32),
                     ((0, n_dst_p - plan.n_dst), (0, 0)))
    d_p = jnp.pad(d_col.astype(jnp.float32),
                  ((0, n_dst_p - plan.n_dst), (0, 0)))

    if src_resident:
        src_spec = pl.BlockSpec((n_src_p, f), lambda i, s, nnz, tbl: (0, 0))
    else:
        src_spec = pl.BlockSpec((tk, f), lambda i, s, nnz, tbl: (tbl[i, s], 0))

    # VMEM footprint (double-buffered pipeline streams) + fixed headroom,
    # capped below the physical per-core capacity (v7x: 64 MiB).
    est = (2 * tm * _lane(tk) * itemsize                                   # adjacency stream
           + 2 * (src_vmem if src_resident else tk * _lane(f) * itemsize)  # source embeddings
           + 2 * tm * _lane(f) * 4                                         # self-embedding tile
           + 2 * tm * 128 * 4                                              # degree column tile
           + 2 * tm * _lane(f) * 4)                                        # output/accumulator tile
    vmem_limit = int(min(est + (8 << 20), _vmem_capacity_bytes() * 85 // 100))

    out = pl.pallas_call(
        _make_gcn_kernel(tk, src_resident),
        out_shape=jax.ShapeDtypeStruct((n_dst_p, f), jnp.float32),
        grid_spec=pltpu.PrefetchScalarGridSpec(
            num_scalar_prefetch=2,                       # (nnz, tbl) -> SMEM
            grid=(n_i, plan.max_nnz),
            in_specs=[
                pl.BlockSpec((tm, tk), lambda i, s, nnz, tbl: (i, tbl[i, s])),
                src_spec,
                pl.BlockSpec((tm, f), lambda i, s, nnz, tbl: (i, 0)),
                pl.BlockSpec((tm, 1), lambda i, s, nnz, tbl: (i, 0)),
            ],
            out_specs=pl.BlockSpec((tm, f), lambda i, s, nnz, tbl: (i, 0)),
        ),
        compiler_params=pltpu.CompilerParams(
            dimension_semantics=("parallel", "arbitrary"),
            vmem_limit_bytes=vmem_limit),
    )(plan.nnz, plan.tbl, plan.adj, src_p, self_p, d_p)
    return out[:plan.n_dst]


def line_gcn_forward(ui_plan, iu_plan, d_i_train, d_j_train,
                     embed_user, embed_item):
    # d_i_train / d_j_train are per-entity scalars, matching the
    # python-list -> FloatTensor(N,1) -> expand(-1, F) pattern of the module.
    d_i = jnp.asarray(d_i_train, jnp.float32).reshape(-1, 1)
    d_j = jnp.asarray(d_j_train, jnp.float32).reshape(-1, 1)
    gcn1_users = gcn_propagate(ui_plan, embed_item, embed_user, d_i)
    gcn1_items = gcn_propagate(iu_plan, embed_user, embed_item, d_j)
    gcn_users = jnp.concatenate([embed_user.astype(jnp.float32), gcn1_users], axis=-1)
    gcn_items = jnp.concatenate([embed_item.astype(jnp.float32), gcn1_items], axis=-1)
    return gcn_users, gcn_items


if __name__ == "__main__":
    user_num, item_num, factor_num = 64, 96, 32

    key = jax.random.PRNGKey(0)
    k_u, k_i, k_adj, k_di, k_dj = jax.random.split(key, 5)

    # nn.init.normal_(weight, std=0.01)
    embed_user = (0.01 * jax.random.normal(k_u, (user_num, factor_num))).astype(jnp.float32)
    embed_item = (0.01 * jax.random.normal(k_i, (item_num, factor_num))).astype(jnp.float32)

    # Synthetic normalized interaction matrix (dense stand-in for torch.sparse).
    interactions = (jax.random.uniform(k_adj, (user_num, item_num)) < 0.1).astype(jnp.float32)
    user_item_matrix = interactions / (interactions.sum(axis=1, keepdims=True) + 1.0)
    item_user_matrix = interactions.T / (interactions.T.sum(axis=1, keepdims=True) + 1.0)

    # Degree scaling terms (one scalar per user / per item).
    d_i_train = jax.random.uniform(k_di, (user_num,), minval=0.1, maxval=1.0).astype(jnp.float32)
    d_j_train = jax.random.uniform(k_dj, (item_num,), minval=0.1, maxval=1.0).astype(jnp.float32)

    # One-time preprocessing (bf16 cast + pad + block-sparse schedule); the
    # adjacency matrices are static, so this amortizes across forward calls.
    ui_plan = prepare_adjacency(user_item_matrix)
    iu_plan = prepare_adjacency(item_user_matrix)

    gcn_users, gcn_items = line_gcn_forward(
        ui_plan, iu_plan, d_i_train, d_j_train, embed_user, embed_item)
    jax.block_until_ready((gcn_users, gcn_items))

    # Reference check against plain JAX, using the same bf16 quantization of
    # the adjacency / source-embedding operands that the kernel streams.
    def ref_concat(adj_q, src_q, self_emb, d):
        return jnp.concatenate(
            [self_emb,
             jnp.dot(adj_q, src_q, preferred_element_type=jnp.float32)
             + self_emb * d[:, None]], axis=-1)

    q = lambda x: x.astype(jnp.bfloat16).astype(jnp.float32)
    ref_users = ref_concat(q(user_item_matrix), q(embed_item), embed_user, d_i_train)
    ref_items = ref_concat(q(item_user_matrix), q(embed_user), embed_item, d_j_train)

    assert gcn_users.shape == (user_num, 2 * factor_num)
    assert gcn_items.shape == (item_num, 2 * factor_num)
    np.testing.assert_allclose(np.asarray(gcn_users), np.asarray(ref_users),
                               rtol=1e-4, atol=1e-5)
    np.testing.assert_allclose(np.asarray(gcn_items), np.asarray(ref_items),
                               rtol=1e-4, atol=1e-5)

    # Exercise the streaming (non-resident source-table) kernel variant too.
    gcn1_users_stream = gcn_propagate(ui_plan, embed_item, embed_user,
                                      d_i_train.reshape(-1, 1), src_resident=False)
    np.testing.assert_allclose(np.asarray(gcn1_users_stream),
                               np.asarray(ref_users[:, factor_num:]),
                               rtol=1e-4, atol=1e-5)

    # Smoke-test the f32-adjacency fallback (for callers that cannot accept the
    # bf16 streaming quantization).  Loose tolerance: MXU f32 matmul precision
    # may differ slightly between the Pallas dot and the XLA reference dot.
    ui_plan_f32 = prepare_adjacency(user_item_matrix, stream_dtype=jnp.float32)
    gcn1_users_f32 = gcn_propagate(ui_plan_f32, embed_item, embed_user,
                                   d_i_train.reshape(-1, 1))
    ref_f32 = (jnp.dot(user_item_matrix, embed_item,
                       preferred_element_type=jnp.float32)
               + embed_user * d_i_train[:, None])
    np.testing.assert_allclose(np.asarray(gcn1_users_f32), np.asarray(ref_f32),
                               rtol=2e-2, atol=1e-4)

    print("KERNEL_OK")
</pallas_src>

<mosaic_0001>
module attributes {stable_mosaic.version = 11 : i64} {
  func.func @kernel(%arg0: i32, %arg1: i32, %arg2: memref<1xi32, #tpu.memory_space<smem>>, %arg3: memref<1x1xi32, #tpu.memory_space<smem>>, %arg4: memref<64x128xbf16, #tpu.memory_space<vmem>>, %arg5: memref<128x32xbf16, #tpu.memory_space<vmem>>, %arg6: memref<64x32xf32, #tpu.memory_space<vmem>>, %arg7: memref<64x1xf32, #tpu.memory_space<vmem>>, %arg8: memref<64x32xf32, #tpu.memory_space<vmem>>) attributes {dimension_semantics = [#tpu.dimension_semantics<parallel>, #tpu.dimension_semantics<arbitrary>], iteration_bounds = array<i64: 1, 1>, scalar_prefetch = 2 : i64, scratch_operands = 0 : i64, tpu.core_type = #tpu.core_type<tc>, window_params = [{transform_indices = @transform_0, window_bounds = array<i64: 64, 128>}, {pipeline_mode = #tpu.pipeline_mode<synchronous>, transform_indices = @transform_1, window_bounds = array<i64: 128, 32>}, {transform_indices = @transform_2, window_bounds = array<i64: 64, 32>}, {transform_indices = @transform_3, window_bounds = array<i64: 64, 1>}, {transform_indices = @transform_4, window_bounds = array<i64: 64, 32>}]} {
    %c0_i32 = arith.constant 0 : i32
    %0 = arith.cmpi eq, %arg1, %c0_i32 : i32
    %1 = arith.extui %0 : i1 to i32
    %c0_i32_0 = arith.constant 0 : i32
    %2 = arith.cmpi ne, %1, %c0_i32_0 : i32
    scf.if %2 {
      %c0 = arith.constant 0 : index
      %c0_2 = arith.constant 0 : index
      %8 = vector.load %arg6[%c0, %c0_2] : memref<64x32xf32, #tpu.memory_space<vmem>>, vector<64x32xf32>
      %c0_3 = arith.constant 0 : index
      %c0_4 = arith.constant 0 : index
      %9 = vector.load %arg7[%c0_3, %c0_4] : memref<64x1xf32, #tpu.memory_space<vmem>>, vector<64x1xf32>
      %10 = vector.broadcast %9 : vector<64x1xf32> to vector<64x32xf32>
      %11 = arith.mulf %8, %10 : vector<64x32xf32>
      %c0_5 = arith.constant 0 : index
      %c0_6 = arith.constant 0 : index
      %12 = vector.load %arg8[%c0_5, %c0_6] : memref<64x32xf32, #tpu.memory_space<vmem>>, vector<64x32xf32>
      tpu.vector_store %arg8[%c0_5, %c0_6], %11 {strides = array<i32>} : memref<64x32xf32, #tpu.memory_space<vmem>>, vector<64x32xf32>,
    } else {
    }
    %3 = arith.index_cast %arg0 : i32 to index
    %4 = memref.load %arg2[%3] : memref<1xi32, #tpu.memory_space<smem>>
    %5 = arith.cmpi slt, %arg1, %4 : i32
    %6 = arith.extui %5 : i1 to i32
    %c0_i32_1 = arith.constant 0 : i32
    %7 = arith.cmpi ne, %6, %c0_i32_1 : i32
    scf.if %7 {
      %8 = arith.index_cast %arg0 : i32 to index
      %9 = arith.index_cast %arg1 : i32 to index
      %10 = memref.load %arg3[%8, %9] : memref<1x1xi32, #tpu.memory_space<smem>>
      %c128_i32 = arith.constant 128 : i32
      %11 = arith.muli %10, %c128_i32 : i32
      %12 = tpu.assume_multiple %11, 128 : i32
      %13 = arith.index_cast %12 : i32 to index
      %c0 = arith.constant 0 : index
      %14 = vector.load %arg5[%13, %c0] : memref<128x32xbf16, #tpu.memory_space<vmem>>, vector<128x32xbf16>
      %c0_2 = arith.constant 0 : index
      %c0_3 = arith.constant 0 : index
      %15 = vector.load %arg8[%c0_2, %c0_3] : memref<64x32xf32, #tpu.memory_space<vmem>>, vector<64x32xf32>
      %c0_4 = arith.constant 0 : index
      %c0_5 = arith.constant 0 : index
      %16 = vector.load %arg4[%c0_4, %c0_5] : memref<64x128xbf16, #tpu.memory_space<vmem>>, vector<64x128xbf16>
      %cst = arith.constant dense<0.000000e+00> : vector<64x32xf32>
      %17 = tpu.matmul %16, %14, %cst {dimension_numbers = #tpu.dot_dimension_numbers<[1], [0], [0], [1], [0, 0, 1, 1], [], []>} : vector<64x128xbf16>, vector<128x32xbf16>, vector<64x32xf32> -> vector<64x32xf32>
      %18 = arith.addf %15, %17 : vector<64x32xf32>
      %c0_6 = arith.constant 0 : index
      %c0_7 = arith.constant 0 : index
      %19 = vector.load %arg8[%c0_6, %c0_7] : memref<64x32xf32, #tpu.memory_space<vmem>>, vector<64x32xf32>
      tpu.vector_store %arg8[%c0_6, %c0_7], %18 {strides = array<i32>} : memref<64x32xf32, #tpu.memory_space<vmem>>, vector<64x32xf32>,
    } else {
    }
    return
  }
  func.func @transform_0(%arg0: i32, %arg1: i32, %arg2: memref<1xi32, #tpu.memory_space<smem>>, %arg3: memref<1x1xi32, #tpu.memory_space<smem>>) -> (i32, i32) {
    %0 = arith.index_cast %arg0 : i32 to index
    %1 = arith.index_cast %arg1 : i32 to index
    %2 = memref.load %arg3[%0, %1] : memref<1x1xi32, #tpu.memory_space<smem>>
    %c0_i32 = arith.constant 0 : i32
    return %arg0, %2 : i32, i32
  }
  func.func @transform_1(%arg0: i32, %arg1: i32, %arg2: memref<1xi32, #tpu.memory_space<smem>>, %arg3: memref<1x1xi32, #tpu.memory_space<smem>>) -> (i32, i32) {
    %c0_i32 = arith.constant 0 : i32
    %c0_i32_0 = arith.constant 0 : i32
    %c0_i32_1 = arith.constant 0 : i32
    return %c0_i32, %c0_i32_0 : i32, i32
  }
  func.func @transform_2(%arg0: i32, %arg1: i32, %arg2: memref<1xi32, #tpu.memory_space<smem>>, %arg3: memref<1x1xi32, #tpu.memory_space<smem>>) -> (i32, i32) {
    %c0_i32 = arith.constant 0 : i32
    %c0_i32_0 = arith.constant 0 : i32
    return %arg0, %c0_i32 : i32, i32
  }
  func.func @transform_3(%arg0: i32, %arg1: i32, %arg2: memref<1xi32, #tpu.memory_space<smem>>, %arg3: memref<1x1xi32, #tpu.memory_space<smem>>) -> (i32, i32) {
    %c0_i32 = arith.constant 0 : i32
    %c0_i32_0 = arith.constant 0 : i32
    return %arg0, %c0_i32 : i32, i32
  }
  func.func @transform_4(%arg0: i32, %arg1: i32, %arg2: memref<1xi32, #tpu.memory_space<smem>>, %arg3: memref<1x1xi32, #tpu.memory_space<smem>>) -> (i32, i32) {
    %c0_i32 = arith.constant 0 : i32
    %c0_i32_0 = arith.constant 0 : i32
    return %arg0, %c0_i32 : i32, i32
  }
}

</mosaic_0001>

<llo_original>
// kernel: tpu_custom_call.1
$region0: #{tpu_custom_call.1}
  #allocation0 [shape = 'u32[]', space=smem, size = 0x4, offset = 0x4, fixed_abs, tag = 'smem constant byte address 0x4 - core index']
  #allocation1 [shape = 'u32[144,128]{1,0:T(1,128)}', space=vmem, size = 0x12000, scoped, tag = 'internal scratch']
  #allocation2 [shape = 's32[1]{0}', space=sflag, size = 0x4, scoped, tag = 'scoped memory for tpu_custom_call.1']
  #allocation3 [shape = 's32[1]{0:T(128)S(6)}', space=smem, size = 0x200, scoped, tag = 'prefetched SMEM operand 0']
  #allocation4 [shape = 's32[1,1]{1,0:T(1,128)S(6)}', space=smem, size = 0x200, scoped, tag = 'prefetched SMEM operand 1']
  %s0 = inlined_call_operand.<no memory space> [shape: s32[1], index: 0, kind: input, shape index: {}]
  %s1 = inlined_call_operand.<no memory space> [shape: s32[1,1], index: 1, kind: input, shape index: {}]
  %s2 = inlined_call_operand.vmem [shape: bf16[64,128], index: 2, kind: input, shape index: {}]
  %s3 = inlined_call_operand.vmem [shape: bf16[128,32], index: 3, kind: input, shape index: {}]
  %s4 = inlined_call_operand.vmem [shape: f32[64,32], index: 4, kind: input, shape index: {}]
  %s5 = inlined_call_operand.vmem [shape: f32[64,1], index: 5, kind: input, shape index: {}]
  %s6 = inlined_call_operand.vmem [shape: f32[64,32], index: 6, kind: output, shape index: {}]
  %s7 = sld [smem:[#allocation0]]
  $region34: #{tpu_custom_call.1} parent=0
    _
  %s9 = ssub.s32 1, %s7
  %s10 = scalar_select 0, %s9, %s7
  %11 = sst [smem:[#allocation3]] %s0
  %12 = sst [smem:[#allocation4]] %s1
  // Predicated region
  $region2: #{tpu_custom_call.1} parent=0 // pred_check
    _
  $region3: #{tpu_custom_call.1} parent=0 // pred_check_branch
    %14 = sbr.rel (0) target = $region5
  $region4: #{tpu_custom_call.1} parent=0 // pred_region
    %s15 = sadd.s32 0, 0
    %s16 = smul.u32 %s15, 128
    %s17 = sadd.s32 %s16, 0
    %s18 = sld [smem:[#allocation4 + %s17]]
    %p19 = scmp.lt.s32.totalorder %s18, 0
    %s20 = scalar_select %p19, %s18, 0
    %s21 = smul.addr %s20, 4
    %s22 = scalar_lea.vmem %s2, %s21
    %s23 = sadd.s32 0, 0
    %s24 = smul.u32 %s23, 128
    %s25 = sadd.s32 %s24, 0
    %s26 = sld [smem:[#allocation4 + %s25]]
  $region5: #{tpu_custom_call.1} parent=0 // pred_fallthru
    _
  // Predicated region
  $region6: #{tpu_custom_call.1} parent=0 // pred_check
    _
  $region7: #{tpu_custom_call.1} parent=0 // pred_check_branch
    %28 = sbr.rel (0) target = $region9
  $region8: #{tpu_custom_call.1} parent=0 // pred_region
    _
  $region9: #{tpu_custom_call.1} parent=0 // pred_fallthru
    _
  // Predicated region
  $region10: #{tpu_custom_call.1} parent=0 // pred_check
    _
  $region11: #{tpu_custom_call.1} parent=0 // pred_check_branch
    %30 = sbr.rel (0) target = $region13
  $region12: #{tpu_custom_call.1} parent=0 // pred_region
    _
  $region13: #{tpu_custom_call.1} parent=0 // pred_fallthru
    _
  // Predicated region
  $region14: #{tpu_custom_call.1} parent=0 // pred_check
    _
  $region15: #{tpu_custom_call.1} parent=0 // pred_check_branch
    %32 = sbr.rel (0) target = $region17
  $region16: #{tpu_custom_call.1} parent=0 // pred_region
    _
  $region17: #{tpu_custom_call.1} parent=0 // pred_fallthru
    _
  %s33 = sadd.s32 0, 0
  %s34 = smul.u32 %s33, 128
  %s35 = sadd.s32 %s34, 0
  %s36 = sld [smem:[#allocation4 + %s35]]
  %p37 = scmp.lt.s32.totalorder %s36, 0
  %s38 = scalar_select %p37, %s36, 0
  %s39 = smul.addr %s38, 4
  %s40 = scalar_lea.vmem %s2, %s39
  %s41 = sadd.s32 0, 0
  %s42 = smul.u32 %s41, 128
  %s43 = sadd.s32 %s42, 0
  %s44 = sld [smem:[#allocation4 + %s43]]
  %p45 = scmp.lt.s32.totalorder %s44, 0
  %s46 = scalar_select %p45, %s44, 0
  %s47 = smul.addr %s46, 4
  %s48 = scalar_lea.vmem %s2, %s47
  %s49 = sadd.s32 0, 0
  %s50 = smul.u32 %s49, 128
  %s51 = sadd.s32 %s50, 0
  %s52 = sld [smem:[#allocation4 + %s51]]
  %p54 = scmp.eq.s32.totalorder 0, 0
  // Predicated region
  $region18: #{tpu_custom_call.1} parent=0 // pred_check
    %p55 = pneg %p54
  $region19: #{tpu_custom_call.1} parent=0 // pred_check_branch
    %57 = sbr.rel (%p55) target = $region21
  $region20: #{tpu_custom_call.1} parent=0 // pred_region
    %v58 = vld [vmem:[%s4] sm:$0xff]
    %v59 = vld [vmem:[%s4 + $0x8] sm:$0xff]
    %v60 = vld [vmem:[%s4 + $0x10] sm:$0xff]
    %v61 = vld [vmem:[%s4 + $0x18] sm:$0xff]
    %v62 = vld [vmem:[%s4 + $0x20] sm:$0xff]
    %v63 = vld [vmem:[%s4 + $0x28] sm:$0xff]
    %v64 = vld [vmem:[%s4 + $0x30] sm:$0xff]
    %v65 = vld [vmem:[%s4 + $0x38] sm:$0xff]
    %v66 = vld [vmem:[%s5] sm:$0xff]
    %v67 = vld [vmem:[%s5 + $0x8] sm:$0xff]
    %v68 = vld [vmem:[%s5 + $0x10] sm:$0xff]
    %v69 = vld [vmem:[%s5 + $0x18] sm:$0xff]
    %v70 = vld [vmem:[%s5 + $0x20] sm:$0xff]
    %v71 = vld [vmem:[%s5 + $0x28] sm:$0xff]
    %v72 = vld [vmem:[%s5 + $0x30] sm:$0xff]
    %v73 = vld [vmem:[%s5 + $0x38] sm:$0xff]
    %75 = vset.pattern.permute.xlu0 0
    %76 = vperm.xlu0 %75, %v66
    %v77 = vpop.permute.xlu0 %76
    %80 = vset.pattern.permute.xlu0 0
    %81 = vperm.xlu0 %80, %v67
    %v82 = vpop.permute.xlu0 %81
    %85 = vset.pattern.permute.xlu0 0
    %86 = vperm.xlu0 %85, %v68
    %v87 = vpop.permute.xlu0 %86
    %90 = vset.pattern.permute.xlu0 0
    %91 = vperm.xlu0 %90, %v69
    %v92 = vpop.permute.xlu0 %91
    %95 = vset.pattern.permute.xlu0 0
    %96 = vperm.xlu0 %95, %v70
    %v97 = vpop.permute.xlu0 %96
    %100 = vset.pattern.permute.xlu0 0
    %101 = vperm.xlu0 %100, %v71
    %v102 = vpop.permute.xlu0 %101
    %105 = vset.pattern.permute.xlu0 0
    %106 = vperm.xlu0 %105, %v72
    %v107 = vpop.permute.xlu0 %106
    %110 = vset.pattern.permute.xlu0 0
    %111 = vperm.xlu0 %110, %v73
    %v112 = vpop.permute.xlu0 %111
    %v114 = vmul.f32 %v58, %v77
    %v115 = vmul.f32 %v59, %v82
    %v116 = vmul.f32 %v60, %v87
    %v117 = vmul.f32 %v61, %v92
    %v118 = vmul.f32 %v62, %v97
    %v119 = vmul.f32 %v63, %v102
    %v120 = vmul.f32 %v64, %v107
    %v121 = vmul.f32 %v65, %v112
    %vm122 = vcmask 261120
    %123 = vst.msk [vmem:[%s6] sm:$0xff] %vm122, %v114
    %124 = vst.msk [vmem:[%s6 + $0x8] sm:$0xff] %vm122, %v115
    %125 = vst.msk [vmem:[%s6 + $0x10] sm:$0xff] %vm122, %v116
    %126 = vst.msk [vmem:[%s6 + $0x18] sm:$0xff] %vm122, %v117
    %127 = vst.msk [vmem:[%s6 + $0x20] sm:$0xff] %vm122, %v118
    %128 = vst.msk [vmem:[%s6 + $0x28] sm:$0xff] %vm122, %v119
    %129 = vst.msk [vmem:[%s6 + $0x30] sm:$0xff] %vm122, %v120
    %130 = vst.msk [vmem:[%s6 + $0x38] sm:$0xff] %vm122, %v121
  $region21: #{tpu_custom_call.1} parent=0 // pred_fallthru
    _
  %s131 = sld [smem:[#allocation3]]
  %p132 = scmp.lt.s32.totalorder 0, %s131
  // Predicated region
  $region22: #{tpu_custom_call.1} parent=0 // pred_check
    %p133 = pneg %p132
  $region23: #{tpu_custom_call.1} parent=0 // pred_check_branch
    %135 = sbr.rel (%p133) target = $region25
  $region24: #{tpu_custom_call.1} parent=0 // pred_region
    %s136 = sadd.s32 0, 0
    %s137 = smul.u32 %s136, 128
    %s138 = sadd.s32 %s137, 0
    %s139 = sld [smem:[#allocation4 + %s138]]
    %s140 = smul.u32 %s139, 128
    %s141 = sshra.s32 %s140, 3
    %s142 = sand.u32 %s140, 7
    %s143 = smul.addr %s141, 4
    %s144 = scalar_lea.vmem %s3, %s143
    %v145 = vld [vmem:[%s144] sm:$0xf]
    %v146 = vld [vmem:[%s144 + $0x4] sm:$0xf]
    %v147 = vld [vmem:[%s144 + $0x8] sm:$0xf]
    %v148 = vld [vmem:[%s144 + $0xc] sm:$0xf]
    %v149 = vld [vmem:[%s144 + $0x10] sm:$0xf]
    %v150 = vld [vmem:[%s144 + $0x14] sm:$0xf]
    %v151 = vld [vmem:[%s144 + $0x18] sm:$0xf]
    %v152 = vld [vmem:[%s144 + $0x1c] sm:$0xf]
    %v153 = vld [vmem:[%s144 + $0x20] sm:$0xf]
    %v154 = vld [vmem:[%s144 + $0x24] sm:$0xf]
    %v155 = vld [vmem:[%s144 + $0x28] sm:$0xf]
    %v156 = vld [vmem:[%s144 + $0x2c] sm:$0xf]
    %v157 = vld [vmem:[%s144 + $0x30] sm:$0xf]
    %v158 = vld [vmem:[%s144 + $0x34] sm:$0xf]
    %v159 = vld [vmem:[%s144 + $0x38] sm:$0xf]
    %v160 = vld [vmem:[%s144 + $0x3c] sm:$0xf]
    %v161 = vld [vmem:[%s6] sm:$0xff]
    %v162 = vld [vmem:[%s6 + $0x8] sm:$0xff]
    %v163 = vld [vmem:[%s6 + $0x10] sm:$0xff]
    %v164 = vld [vmem:[%s6 + $0x18] sm:$0xff]
    %v165 = vld [vmem:[%s6 + $0x20] sm:$0xff]
    %v166 = vld [vmem:[%s6 + $0x28] sm:$0xff]
    %v167 = vld [vmem:[%s6 + $0x30] sm:$0xff]
    %v168 = vld [vmem:[%s6 + $0x38] sm:$0xff]
    %v169 = vld [vmem:[%s48] sm:$0xf]
    %v170 = vld [vmem:[%s48 + $0x4] sm:$0xf]
    %v171 = vld [vmem:[%s48 + $0x8] sm:$0xf]
    %v172 = vld [vmem:[%s48 + $0xc] sm:$0xf]
    %v173 = vld [vmem:[%s48 + $0x10] sm:$0xf]
    %v174 = vld [vmem:[%s48 + $0x14] sm:$0xf]
    %v175 = vld [vmem:[%s48 + $0x18] sm:$0xf]
    %v176 = vld [vmem:[%s48 + $0x1c] sm:$0xf]
    %v185 = vunpack.c.l.b16 %v169
    %v186 = vunpack.c.l.b16 %v170
    %v187 = vunpack.c.l.b16 %v171
    %v188 = vunpack.c.l.b16 %v172
    %v189 = vunpack.c.l.b16 %v173
    %v190 = vunpack.c.l.b16 %v174
    %v191 = vunpack.c.l.b16 %v175
    %v192 = vunpack.c.l.b16 %v176
    %v193 = vpack.c.b16 %v186, %v185
    %v194 = vpack.c.b16 %v188, %v187
    %v195 = vpack.c.b16 %v190, %v189
    %v196 = vpack.c.b16 %v192, %v191
    %v217 = vunpack.c.l.b16 %v145
    %v218 = vunpack.c.l.b16 %v146
    %v219 = vunpack.c.l.b16 %v147
    %v220 = vunpack.c.l.b16 %v148
    %v221 = vunpack.c.l.b16 %v149
    %v222 = vunpack.c.l.b16 %v150
    %v223 = vunpack.c.l.b16 %v151
    %v224 = vunpack.c.l.b16 %v152
    %v225 = vunpack.c.l.b16 %v153
    %v226 = vunpack.c.l.b16 %v154
    %v227 = vunpack.c.l.b16 %v155
    %v228 = vunpack.c.l.b16 %v156
    %v229 = vunpack.c.l.b16 %v157
    %v230 = vunpack.c.l.b16 %v158
    %v231 = vunpack.c.l.b16 %v159
    %v232 = vunpack.c.l.b16 %v160
    %v233 = vpack.c.b16 %v218, %v217
    %v234 = vpack.c.b16 %v220, %v219
    %v235 = vpack.c.b16 %v222, %v221
    %v236 = vpack.c.b16 %v224, %v223
    %v237 = vpack.c.b16 %v226, %v225
    %v238 = vpack.c.b16 %v228, %v227
    %v239 = vpack.c.b16 %v230, %v229
    %v240 = vpack.c.b16 %v232, %v231
    %249 = vmatprep.subr.bf16.mxu0 0
    %250 = vmatpush1.bf16.msra.mxu0 %v233
    %251 = vmatprep.subr.bf16.mxu0 0
    %252 = vmatpush1.bf16.msra.mxu0 %v234
    %253 = vmatprep.subr.bf16.mxu0 0
    %254 = vmatpush1.bf16.msra.mxu0 %v235
    %255 = vmatprep.subr.bf16.mxu0 0
    %256 = vmatpush1.bf16.msra.mxu0 %v236
    %257 = vmatprep.subr.bf16.mxu0 0
    %258 = vmatpush1.bf16.msra.mxu0 %v237
    %259 = vmatprep.subr.bf16.mxu0 0
    %260 = vmatpush1.bf16.msra.mxu0 %v238
    %261 = vmatprep.subr.bf16.mxu0 0
    %262 = vmatpush1.bf16.msra.mxu0 %v239
    %263 = vmatprep.subr.bf16.mxu0 0
    %264 = vmatpush1.bf16.msra.mxu0 %v240
    %265 = vmatprep.subr.bf16.mxu0 0
    %266 = vmatpush1.bf16.msra.mxu0 0
    %267 = vmatprep.subr.bf16.mxu0 0
    %268 = vmatpush1.bf16.msra.mxu0 0
    %269 = vmatprep.subr.bf16.mxu0 0
    %270 = vmatpush1.bf16.msra.mxu0 0
    %271 = vmatprep.subr.bf16.mxu0 0
    %272 = vmatpush1.bf16.msra.mxu0 0
    %273 = vmatprep.subr.bf16.mxu0 0
    %274 = vmatpush1.bf16.msra.mxu0 0
    %275 = vmatprep.subr.bf16.mxu0 0
    %276 = vmatpush1.bf16.msra.mxu0 0
    %277 = vmatprep.subr.bf16.mxu0 0
    %278 = vmatpush1.bf16.msra.mxu0 0
    %279 = vmatprep.subr.bf16.mxu0 0
    %280 = vmatpush1.bf16.msra.mxu0 0
    %281 = vmatprep.mubr.bf16.mxu0 0
    %282 = vmatmul.mubr.bf16.gmra.mrb[0].mxu0 %v193
    %v283 = vpop.f32.mrb[0].mxu0
    %v284 = vadd.f32 0.0, %v283
    %v285 = vpop.f32.mrb[0].mxu0
    %v286 = vpop.f32.mrb[0].mxu0
    %v287 = vadd.f32 0.0, %v286
    %v288 = vpop.f32.mrb[0].mxu0
    %289 = vmatprep.mubr.bf16.mxu0 0
    %290 = vmatmul.mubr.bf16.gmra.mrb[0].mxu0 %v194
    %v291 = vpop.f32.mrb[0].mxu0
    %v292 = vadd.f32 0.0, %v291
    %v293 = vpop.f32.mrb[0].mxu0
    %v294 = vpop.f32.mrb[0].mxu0
    %v295 = vadd.f32 0.0, %v294
    %v296 = vpop.f32.mrb[0].mxu0
    %297 = vmatprep.mubr.bf16.mxu0 0
    %298 = vmatmul.mubr.bf16.gmra.mrb[0].mxu0 %v195
    %v299 = vpop.f32.mrb[0].mxu0
    %v300 = vadd.f32 0.0, %v299
    %v301 = vpop.f32.mrb[0].mxu0
    %v302 = vpop.f32.mrb[0].mxu0
    %v303 = vadd.f32 0.0, %v302
    %v304 = vpop.f32.mrb[0].mxu0
    %305 = vmatprep.mubr.bf16.mxu0 0
    %306 = vmatmul.mubr.bf16.gmra.mrb[0].mxu0 %v196
    %v307 = vpop.f32.mrb[0].mxu0
    %v308 = vadd.f32 0.0, %v307
    %v309 = vpop.f32.mrb[0].mxu0
    %v310 = vpop.f32.mrb[0].mxu0
    %v311 = vadd.f32 0.0, %v310
    %v312 = vpop.f32.mrb[0].mxu0
    %313 = vdwg.mxu0
    %v314 = vadd.f32 %v161, %v284
    %v315 = vadd.f32 %v162, %v287
    %v316 = vadd.f32 %v163, %v292
    %v317 = vadd.f32 %v164, %v295
    %v318 = vadd.f32 %v165, %v300
    %v319 = vadd.f32 %v166, %v303
    %v320 = vadd.f32 %v167, %v308
    %v321 = vadd.f32 %v168, %v311
    %vm322 = vcmask 261120
    %323 = vst.msk [vmem:[%s6] sm:$0xff] %vm322, %v314
    %324 = vst.msk [vmem:[%s6 + $0x8] sm:$0xff] %vm322, %v315
    %325 = vst.msk [vmem:[%s6 + $0x10] sm:$0xff] %vm322, %v316
    %326 = vst.msk [vmem:[%s6 + $0x18] sm:$0xff] %vm322, %v317
    %327 = vst.msk [vmem:[%s6 + $0x20] sm:$0xff] %vm322, %v318
    %328 = vst.msk [vmem:[%s6 + $0x28] sm:$0xff] %vm322, %v319
    %329 = vst.msk [vmem:[%s6 + $0x30] sm:$0xff] %vm322, %v320
    %330 = vst.msk [vmem:[%s6 + $0x38] sm:$0xff] %vm322, %v321
  $region25: #{tpu_custom_call.1} parent=0 // pred_fallthru
    _
  // Predicated region
  $region26: #{tpu_custom_call.1} parent=0 // pred_check
    _
  $region27: #{tpu_custom_call.1} parent=0 // pred_check_branch
    %332 = sbr.rel (0) target = $region29
  $region28: #{tpu_custom_call.1} parent=0 // pred_region
    _
  $region29: #{tpu_custom_call.1} parent=0 // pred_fallthru
    _
  // Predicated region
  $region30: #{tpu_custom_call.1} parent=0 // pred_check
    _
  $region31: #{tpu_custom_call.1} parent=0 // pred_check_branch
    %334 = sbr.rel (0) target = $region33
  $region32: #{tpu_custom_call.1} parent=0 // pred_region
    _
  $region33: #{tpu_custom_call.1} parent=0 // pred_fallthru
    _

</llo_original>
